<compile_context>
chip_gen: v7x
topology: tpu7x:2x2x1
jax: 0.10.0
libtpu: 0.0.40
codegen_flags: <defaults>
</compile_context>

<pallas_src>
import math
import functools

import jax
import jax.numpy as jnp
from jax.experimental import pallas as pl
from jax.experimental.pallas import tpu as pltpu

LN_EPS = 1e-12


def _self_output_kernel(x_ref, res_ref, w_ref, b_ref, g_ref, beta_ref, o_ref):
    # Dense: [tm, H] @ [H, H] on the MXU (bf16 operands, f32 accumulate).
    h = jnp.dot(x_ref[...].astype(jnp.bfloat16), w_ref[...],
                preferred_element_type=jnp.float32)
    h = h + b_ref[...]

    # TODO(synk): dropout is identity here (inference / eval mode); no RNG mask.

    # Residual add before LayerNorm (BertSelfOutput semantics), in f32.
    h = h + res_ref[...].astype(jnp.float32)

    # TF-style LayerNorm over the last dim, single-pass statistics with a
    # clamp (cancellation can make E[h^2] - E[h]^2 slightly negative).
    m = jnp.mean(h, axis=-1, keepdims=True)
    m2 = jnp.mean(h * h, axis=-1, keepdims=True)
    var = jnp.maximum(m2 - m * m, 0.0)
    inv = jax.lax.rsqrt(var + jnp.float32(LN_EPS))   # EUP slot, not a VPU divide
    h = (h - m) * inv
    h = g_ref[...] * h + beta_ref[...]

    o_ref[...] = h.astype(o_ref.dtype)


def _cdiv(a, b):
    return -(-a // b)


def _round_up(x, m):
    return ((x + m - 1) // m) * m


def _vmem_capacity_bytes():
    try:
        return int(pltpu.get_tpu_info().vmem_capacity_bytes)
    except Exception:
        return 64 * 1024 * 1024   # conservative (v7x per-TC) fallback


def _cores_per_chip():
    try:
        kind = jax.devices()[0].device_kind.lower()
    except Exception:
        return 1
    # v7x exposes 2 TensorCores per chip; v5e / v6e have 1.
    return 2 if "v7" in kind else 1


def _pick_tile(T, H, tm_req, vmem_budget_bytes, act_bytes, n_cores):
    """Pick a sublane-aligned token tile that fits the VMEM budget and, on
    multi-TensorCore chips, gives a core-balanced (even) grid-step count."""
    tm = min(tm_req, T)
    if tm < T:
        tm = max(8, (tm // 8) * 8)

    # Multi-TC chips: make sure the parallel token axis has >= n_cores steps.
    if n_cores > 1 and tm == T and T >= 8 * n_cores:
        tm = min(T, _round_up(_cdiv(T, n_cores), 8))

    def bytes_needed(tm_):
        act = 3 * tm_ * H * act_bytes * 2      # x / residual / out tiles, 2x-buffered
        weight = H * H * 2                     # bf16 weight, single-buffered
        rows = 3 * H * 4                       # bias / gamma / beta, single-buffered
        f32_tmp = 2 * tm_ * H * 4              # compiler f32 intermediates around the MXU
        return act + weight + rows + f32_tmp

    # With bf16 I/O, don't shrink below ~256 rows (keeps the MXU fed on v5e).
    floor = max(8, min(256, tm))
    while tm > floor and bytes_needed(tm) > vmem_budget_bytes:
        tm = max(floor, max(8, ((tm // 2) // 8) * 8))

    # Core balance: keep the step count a multiple of the core count.
    if n_cores > 1 and tm < T:
        steps = _cdiv(T, tm)
        if steps > 1 and steps % n_cores:
            steps = _round_up(steps, n_cores)
            tm = max(8, _round_up(_cdiv(T, steps), 8))
    return tm


@functools.partial(jax.jit, static_argnames=("tm_eff", "vmem_limit"))
def _bert_self_output_call(hidden_states, input_tensor, w_bf16, b, gamma, beta,
                           *, tm_eff, vmem_limit):
    B, S, H = hidden_states.shape
    T = B * S
    x2 = hidden_states.reshape(T, H)
    r2 = input_tensor.reshape(T, H)

    act_bytes = jnp.dtype(hidden_states.dtype).itemsize
    grid = (_cdiv(T, tm_eff),)
    # Partial last tile: padded rows compute garbage LayerNorm values, which is
    # harmless because rows are independent and OOB output writes are masked.
    # Do NOT introduce any cross-row reduction in this kernel.

    flops = 2 * T * H * H + 10 * T * H
    bytes_accessed = (3 * T * H * act_bytes) + (H * H * 2) + (3 * H * 4)

    out2 = pl.pallas_call(
        _self_output_kernel,
        out_shape=jax.ShapeDtypeStruct((T, H), hidden_states.dtype),
        grid_spec=pltpu.PrefetchScalarGridSpec(
            num_scalar_prefetch=0,
            grid=grid,
            in_specs=[
                pl.BlockSpec((tm_eff, H), lambda i: (i, 0)),   # hidden tile
                pl.BlockSpec((tm_eff, H), lambda i: (i, 0)),   # residual tile
                # Grid-invariant operands: single-buffered (never re-fetched).
                pl.BlockSpec((H, H), lambda i: (0, 0),
                             pipeline_mode=pl.Buffered(buffer_count=1)),
                pl.BlockSpec((1, H), lambda i: (0, 0),
                             pipeline_mode=pl.Buffered(buffer_count=1)),
                pl.BlockSpec((1, H), lambda i: (0, 0),
                             pipeline_mode=pl.Buffered(buffer_count=1)),
                pl.BlockSpec((1, H), lambda i: (0, 0),
                             pipeline_mode=pl.Buffered(buffer_count=1)),
            ],
            out_specs=pl.BlockSpec((tm_eff, H), lambda i: (i, 0)),
        ),
        compiler_params=pltpu.CompilerParams(
            dimension_semantics=("parallel",),
            vmem_limit_bytes=int(vmem_limit),
        ),
        cost_estimate=pl.CostEstimate(
            flops=int(flops),
            transcendentals=int(T),           # one rsqrt per row
            bytes_accessed=int(bytes_accessed),
        ),
    )(x2, r2, w_bf16, b.reshape(1, H), gamma.reshape(1, H), beta.reshape(1, H))

    return out2.reshape(B, S, H)


def bert_self_output(hidden_states, input_tensor, w_t, b, gamma, beta, *, tm=1024):
    """hidden_states, input_tensor: [B, S, H] (ideally bf16); w_t: [H_in, H_out]
    (transposed nn.Linear weight, y = x @ w_t + b), ideally pre-cast to bf16
    by the caller so no per-call cast is emitted."""
    B, S, H = hidden_states.shape
    T = B * S

    # Weight should arrive in bf16 (cast hoisted to the caller); only cast here
    # as a fallback so the wrapper still works with an f32 weight.
    w_bf16 = w_t if w_t.dtype == jnp.bfloat16 else w_t.astype(jnp.bfloat16)

    n_cores = _cores_per_chip()
    capacity = _vmem_capacity_bytes()
    vmem_limit = int(0.6 * capacity)                      # ~38 MiB on v7x, ~76 MiB on v5e/v6e
    budget = max(16 << 20, vmem_limit - (8 << 20))        # headroom for Mosaic scratch

    act_bytes = jnp.dtype(hidden_states.dtype).itemsize
    tm_eff = _pick_tile(T, H, tm, budget, act_bytes, n_cores)

    return _bert_self_output_call(hidden_states, input_tensor, w_bf16, b, gamma,
                                  beta, tm_eff=tm_eff, vmem_limit=vmem_limit)


def _reference(hidden_states, input_tensor, w_t, b, gamma, beta):
    h = jnp.einsum("bsh,hk->bsk", hidden_states, w_t) + b
    # dropout identity (eval mode)
    h = h + input_tensor
    u = jnp.mean(h, axis=-1, keepdims=True)
    s = jnp.mean((h - u) ** 2, axis=-1, keepdims=True)
    h = (h - u) / jnp.sqrt(s + LN_EPS)
    return gamma * h + beta


if __name__ == "__main__":
    B, S, H = 2, 8, 32   # batch, seq, hidden (small demo shapes)
    key = jax.random.PRNGKey(0)
    kx, kr, kw, kb = jax.random.split(key, 4)

    hidden_f32 = jax.random.normal(kx, (B, S, H), dtype=jnp.float32)
    resid_f32 = jax.random.normal(kr, (B, S, H), dtype=jnp.float32)

    # bf16 activation interface (no wrapper-side casts inside the kernel path).
    hidden_states = hidden_f32.astype(jnp.bfloat16)
    input_tensor = resid_f32.astype(jnp.bfloat16)

    # nn.Linear(H, H): weight [H_out, H_in]; pass transposed [H_in, H_out],
    # pre-cast to bf16 once (the "stored" dtype of the dense weight).
    bound = 1.0 / math.sqrt(H)
    w = jax.random.uniform(kw, (H, H), minval=-bound, maxval=bound,
                           dtype=jnp.float32)
    b = jax.random.uniform(kb, (H,), minval=-bound, maxval=bound,
                           dtype=jnp.float32)
    w_t_bf16 = w.T.astype(jnp.bfloat16)

    # BertLayerNorm init: weight ones, bias zeros.
    gamma = jnp.ones((H,), dtype=jnp.float32)
    beta = jnp.zeros((H,), dtype=jnp.float32)

    out = bert_self_output(hidden_states, input_tensor, w_t_bf16, b, gamma, beta)
    out = jax.block_until_ready(out)

    # Reference in f32 on the same (bf16-rounded) operands.
    ref = _reference(hidden_states.astype(jnp.float32),
                     input_tensor.astype(jnp.float32),
                     w_t_bf16.astype(jnp.float32), b, gamma, beta)
    assert out.shape == (B, S, H)
    assert out.dtype == hidden_states.dtype
    err = float(jnp.max(jnp.abs(out.astype(jnp.float32) - ref)))
    # bf16 matmul operands and bf16 output -> loose tolerance vs f32 reference.
    assert jnp.allclose(out.astype(jnp.float32), ref, atol=6e-2, rtol=6e-2), err

    print("KERNEL_OK")
</pallas_src>

<mosaic_0001>
module attributes {stable_mosaic.version = 11 : i64} {
  func.func @_self_output_kernel(%arg0: i32, %arg1: memref<16x32xbf16, #tpu.memory_space<vmem>>, %arg2: memref<16x32xbf16, #tpu.memory_space<vmem>>, %arg3: memref<32x32xbf16, #tpu.memory_space<vmem>>, %arg4: memref<1x32xf32, #tpu.memory_space<vmem>>, %arg5: memref<1x32xf32, #tpu.memory_space<vmem>>, %arg6: memref<1x32xf32, #tpu.memory_space<vmem>>, %arg7: memref<16x32xbf16, #tpu.memory_space<vmem>>) attributes {dimension_semantics = [#tpu.dimension_semantics<parallel>], iteration_bounds = array<i64: 1>, scalar_prefetch = 0 : i64, scratch_operands = 0 : i64, tpu.core_type = #tpu.core_type<tc>, window_params = [{transform_indices = @transform_0, window_bounds = array<i64: 16, 32>}, {transform_indices = @transform_1, window_bounds = array<i64: 16, 32>}, {pipeline_mode = #tpu.pipeline_mode<synchronous>, transform_indices = @transform_2, window_bounds = array<i64: 32, 32>}, {pipeline_mode = #tpu.pipeline_mode<synchronous>, transform_indices = @transform_3, window_bounds = array<i64: 1, 32>}, {pipeline_mode = #tpu.pipeline_mode<synchronous>, transform_indices = @transform_4, window_bounds = array<i64: 1, 32>}, {pipeline_mode = #tpu.pipeline_mode<synchronous>, transform_indices = @transform_5, window_bounds = array<i64: 1, 32>}, {transform_indices = @transform_6, window_bounds = array<i64: 16, 32>}]} {
    %c0 = arith.constant 0 : index
    %c0_0 = arith.constant 0 : index
    %0 = vector.load %arg1[%c0, %c0_0] : memref<16x32xbf16, #tpu.memory_space<vmem>>, vector<16x32xbf16>
    %c0_1 = arith.constant 0 : index
    %c0_2 = arith.constant 0 : index
    %1 = vector.load %arg3[%c0_1, %c0_2] : memref<32x32xbf16, #tpu.memory_space<vmem>>, vector<32x32xbf16>
    %cst = arith.constant dense<0.000000e+00> : vector<16x32xf32>
    %2 = tpu.matmul %0, %1, %cst {dimension_numbers = #tpu.dot_dimension_numbers<[1], [0], [0], [1], [0, 0, 1, 1], [], []>} : vector<16x32xbf16>, vector<32x32xbf16>, vector<16x32xf32> -> vector<16x32xf32>
    %c0_3 = arith.constant 0 : index
    %c0_4 = arith.constant 0 : index
    %3 = vector.load %arg4[%c0_3, %c0_4] : memref<1x32xf32, #tpu.memory_space<vmem>>, vector<1x32xf32>
    %4 = vector.broadcast %3 : vector<1x32xf32> to vector<16x32xf32>
    %5 = arith.addf %2, %4 : vector<16x32xf32>
    %c0_5 = arith.constant 0 : index
    %c0_6 = arith.constant 0 : index
    %6 = vector.load %arg2[%c0_5, %c0_6] : memref<16x32xbf16, #tpu.memory_space<vmem>>, vector<16x32xbf16>
    %7 = arith.extf %6 : vector<16x32xbf16> to vector<16x32xf32>
    %8 = arith.addf %5, %7 : vector<16x32xf32>
    %cst_7 = arith.constant dense<0.000000e+00> : vector<16xf32>
    %9 = vector.multi_reduction <add>, %8, %cst_7 [1] : vector<16x32xf32> to vector<16xf32>
    %10 = vector.shape_cast %9 : vector<16xf32> to vector<16x1xf32>
    %cst_8 = arith.constant 3.200000e+01 : f32
    %11 = vector.broadcast %cst_8 : f32 to vector<16x1xf32>
    %12 = arith.divf %10, %11 : vector<16x1xf32>
    %13 = arith.mulf %8, %8 : vector<16x32xf32>
    %cst_9 = arith.constant dense<0.000000e+00> : vector<16xf32>
    %14 = vector.multi_reduction <add>, %13, %cst_9 [1] : vector<16x32xf32> to vector<16xf32>
    %15 = vector.shape_cast %14 : vector<16xf32> to vector<16x1xf32>
    %cst_10 = arith.constant 3.200000e+01 : f32
    %16 = vector.broadcast %cst_10 : f32 to vector<16x1xf32>
    %17 = arith.divf %15, %16 : vector<16x1xf32>
    %18 = arith.mulf %12, %12 : vector<16x1xf32>
    %19 = arith.subf %17, %18 : vector<16x1xf32>
    %cst_11 = arith.constant 0.000000e+00 : f32
    %20 = vector.broadcast %cst_11 : f32 to vector<16x1xf32>
    %21 = arith.maximumf %19, %20 : vector<16x1xf32>
    %cst_12 = arith.constant 9.99999996E-13 : f32
    %22 = vector.broadcast %cst_12 : f32 to vector<16x1xf32>
    %23 = arith.addf %21, %22 : vector<16x1xf32>
    %24 = math.rsqrt %23 : vector<16x1xf32>
    %25 = vector.broadcast %12 : vector<16x1xf32> to vector<16x32xf32>
    %26 = arith.subf %8, %25 : vector<16x32xf32>
    %27 = vector.broadcast %24 : vector<16x1xf32> to vector<16x32xf32>
    %28 = arith.mulf %26, %27 : vector<16x32xf32>
    %c0_13 = arith.constant 0 : index
    %c0_14 = arith.constant 0 : index
    %29 = vector.load %arg5[%c0_13, %c0_14] : memref<1x32xf32, #tpu.memory_space<vmem>>, vector<1x32xf32>
    %30 = vector.broadcast %29 : vector<1x32xf32> to vector<16x32xf32>
    %31 = arith.mulf %30, %28 : vector<16x32xf32>
    %c0_15 = arith.constant 0 : index
    %c0_16 = arith.constant 0 : index
    %32 = vector.load %arg6[%c0_15, %c0_16] : memref<1x32xf32, #tpu.memory_space<vmem>>, vector<1x32xf32>
    %33 = vector.broadcast %32 : vector<1x32xf32> to vector<16x32xf32>
    %34 = arith.addf %31, %33 : vector<16x32xf32>
    %35 = arith.truncf %34 : vector<16x32xf32> to vector<16x32xbf16>
    %c0_17 = arith.constant 0 : index
    %c0_18 = arith.constant 0 : index
    %36 = vector.load %arg7[%c0_17, %c0_18] : memref<16x32xbf16, #tpu.memory_space<vmem>>, vector<16x32xbf16>
    tpu.vector_store %arg7[%c0_17, %c0_18], %35 {strides = array<i32>} : memref<16x32xbf16, #tpu.memory_space<vmem>>, vector<16x32xbf16>,
    return
  }
  func.func @transform_0(%arg0: i32) -> (i32, i32) {
    %c0_i32 = arith.constant 0 : i32
    %c0_i32_0 = arith.constant 0 : i32
    return %arg0, %c0_i32 : i32, i32
  }
  func.func @transform_1(%arg0: i32) -> (i32, i32) {
    %c0_i32 = arith.constant 0 : i32
    %c0_i32_0 = arith.constant 0 : i32
    return %arg0, %c0_i32 : i32, i32
  }
  func.func @transform_2(%arg0: i32) -> (i32, i32) {
    %c0_i32 = arith.constant 0 : i32
    %c0_i32_0 = arith.constant 0 : i32
    %c0_i32_1 = arith.constant 0 : i32
    return %c0_i32, %c0_i32_0 : i32, i32
  }
  func.func @transform_3(%arg0: i32) -> (i32, i32) {
    %c0_i32 = arith.constant 0 : i32
    %c0_i32_0 = arith.constant 0 : i32
    %c0_i32_1 = arith.constant 0 : i32
    return %c0_i32, %c0_i32_0 : i32, i32
  }
  func.func @transform_4(%arg0: i32) -> (i32, i32) {
    %c0_i32 = arith.constant 0 : i32
    %c0_i32_0 = arith.constant 0 : i32
    %c0_i32_1 = arith.constant 0 : i32
    return %c0_i32, %c0_i32_0 : i32, i32
  }
  func.func @transform_5(%arg0: i32) -> (i32, i32) {
    %c0_i32 = arith.constant 0 : i32
    %c0_i32_0 = arith.constant 0 : i32
    %c0_i32_1 = arith.constant 0 : i32
    return %c0_i32, %c0_i32_0 : i32, i32
  }
  func.func @transform_6(%arg0: i32) -> (i32, i32) {
    %c0_i32 = arith.constant 0 : i32
    %c0_i32_0 = arith.constant 0 : i32
    return %arg0, %c0_i32 : i32, i32
  }
}

</mosaic_0001>

<llo_original>
// kernel: _bert_self_output_call.1
$region0: #{_bert_self_output_call.1}
  #allocation0 [shape = 'u32[]', space=smem, size = 0x4, offset = 0x4, fixed_abs, tag = 'smem constant byte address 0x4 - core index']
  #allocation1 [shape = 'u32[144,128]{1,0:T(1,128)}', space=vmem, size = 0x12000, scoped, tag = 'internal scratch']
  %s0 = inlined_call_operand.vmem [shape: bf16[16,32], index: 0, kind: input, shape index: {}]
  %s1 = inlined_call_operand.hbm [shape: bf16[16,32], index: 1, kind: input, shape index: {}]
  %s2 = inlined_call_operand.vmem [shape: bf16[32,32], index: 2, kind: input, shape index: {}]
  %s3 = inlined_call_operand.vmem [shape: f32[1,32], index: 3, kind: input, shape index: {}]
  %s4 = inlined_call_operand.vmem [shape: f32[1,32], index: 4, kind: input, shape index: {}]
  %s5 = inlined_call_operand.vmem [shape: f32[1,32], index: 5, kind: input, shape index: {}]
  %s6 = inlined_call_operand.hbm [shape: bf16[16,32], index: 6, kind: output, shape index: {}]
  %s7 = sld [smem:[#allocation0]]
  $region38: #{_bert_self_output_call.1} parent=0
    _
  %s9 = ssub.s32 1, %s7
  %s10 = scalar_select 0, %s9, %s7
  $region1: #{_bert_self_output_call.1} parent=0
    #allocation2 [shape = 'u8[4096]{0}', space=vmem, size = 0x1000, scoped, tag = 'input window, operand 1, single buffered']
    #allocation3 [shape = 's32[1]{0}', space=sflag, size = 0x4, scoped, tag = 'scoped memory for _bert_self_output_call.1']
    #allocation4 [shape = 's32[1]{0}', space=sflag, size = 0x4, scoped, tag = 'scoped memory for _bert_self_output_call.1']
    #allocation5 [shape = 'u8[4096]{0}', space=vmem, size = 0x1000, scoped, tag = 'output window, operand 0, single buffered']
    %11 = vsyncpa [#allocation3], 0
    %12 = vsyncpa [#allocation4], 0
    // Predicated region
    $region2: #{_bert_self_output_call.1} parent=1 // pred_check
      _
    $region3: #{_bert_self_output_call.1} parent=1 // pred_check_branch
      %14 = sbr.rel (0) target = $region5
    $region4: #{_bert_self_output_call.1} parent=1 // pred_region
      _
    $region5: #{_bert_self_output_call.1} parent=1 // pred_fallthru
      _
    // Predicated region
    $region6: #{_bert_self_output_call.1} parent=1 // pred_check
      _
    $region7: #{_bert_self_output_call.1} parent=1 // pred_check_branch
      %16 = sbr.rel (0) target = $region9
    $region8: #{_bert_self_output_call.1} parent=1 // pred_region
      %s18 = ssub.s32 128, 128
      %19 = vsyncadd [#allocation3], %s18
      %s20 = sshll.u32 [#allocation2], 4
      %s21 = int_to_ptr.vmem [resolvable:$true] %s20
      %26 = dma.hbm_to_vmem [thread:$0]  %s1, 128, %s21, [#allocation3], 64, 64, 4
    $region9: #{_bert_self_output_call.1} parent=1 // pred_fallthru
      _
    // Predicated region
    $region10: #{_bert_self_output_call.1} parent=1 // pred_check
      _
    $region11: #{_bert_self_output_call.1} parent=1 // pred_check_branch
      %28 = sbr.rel (0) target = $region13
    $region12: #{_bert_self_output_call.1} parent=1 // pred_region
      _
    $region13: #{_bert_self_output_call.1} parent=1 // pred_fallthru
      _
    // Predicated region
    $region14: #{_bert_self_output_call.1} parent=1 // pred_check
      _
    $region15: #{_bert_self_output_call.1} parent=1 // pred_check_branch
      %30 = sbr.rel (0) target = $region17
    $region16: #{_bert_self_output_call.1} parent=1 // pred_region
      _
    $region17: #{_bert_self_output_call.1} parent=1 // pred_fallthru
      _
    // Predicated region
    $region18: #{_bert_self_output_call.1} parent=1 // pred_check
      _
    $region19: #{_bert_self_output_call.1} parent=1 // pred_check_branch
      %32 = sbr.rel (0) target = $region21
    $region20: #{_bert_self_output_call.1} parent=1 // pred_region
      _
    $region21: #{_bert_self_output_call.1} parent=1 // pred_fallthru
      _
    // Predicated region
    $region22: #{_bert_self_output_call.1} parent=1 // pred_check
      _
    $region23: #{_bert_self_output_call.1} parent=1 // pred_check_branch
      %34 = sbr.rel (0) target = $region25
    $region24: #{_bert_self_output_call.1} parent=1 // pred_region
      _
    $region25: #{_bert_self_output_call.1} parent=1 // pred_fallthru
      _
    // Predicated region
    $region26: #{_bert_self_output_call.1} parent=1 // pred_check
      _
    $region27: #{_bert_self_output_call.1} parent=1 // pred_check_branch
      %36 = sbr.rel (0) target = $region29
    $region28: #{_bert_self_output_call.1} parent=1 // pred_region
      %37 = dma.done [#allocation3], 128
    $region29: #{_bert_self_output_call.1} parent=1 // pred_fallthru
      _
    %v39 = vld [vmem:[%s0] sm:$0xf]
    %v40 = vld [vmem:[%s0 + $0x4] sm:$0xf]
    %v41 = vld [vmem:[%s2] sm:$0xf]
    %v42 = vld [vmem:[%s2 + $0x4] sm:$0xf]
    %v43 = vld [vmem:[%s2 + $0x8] sm:$0xf]
    %v44 = vld [vmem:[%s2 + $0xc] sm:$0xf]
    %v45 = vld [vmem:[%s3] sm:$0x1]
    %v47 = vlaneseq
    %v48 = vshrl.u32 %v47, 7
    %v49 = vsub.s32 0, %v48
    %v50 = vrot.slane %v45, %v49
    %v54 = vunpack.c.l.b16 %v39
    %v55 = vunpack.c.l.b16 %v40
    %v56 = vpack.c.b16 %v55, %v54
    %v61 = vunpack.c.l.b16 %v41
    %v62 = vunpack.c.l.b16 %v42
    %v63 = vunpack.c.l.b16 %v43
    %v64 = vunpack.c.l.b16 %v44
    %v65 = vpack.c.b16 %v62, %v61
    %v66 = vpack.c.b16 %v64, %v63
    %vm69 = vcmask 261120
    %v71 = vsel %vm69, %v56, 0
    %73 = vmatprep.subr.bf16.mxu0 0
    %74 = vmatpush1.bf16.msra.mxu0 %v65
    %75 = vmatprep.subr.bf16.mxu0 0
    %76 = vmatpush1.bf16.msra.mxu0 %v66
    %77 = vmatprep.subr.bf16.mxu0 0
    %78 = vmatpush1.bf16.msra.mxu0 0
    %79 = vmatprep.subr.bf16.mxu0 0
    %80 = vmatpush1.bf16.msra.mxu0 0
    %81 = vmatprep.subr.bf16.mxu0 0
    %82 = vmatpush1.bf16.msra.mxu0 0
    %83 = vmatprep.subr.bf16.mxu0 0
    %84 = vmatpush1.bf16.msra.mxu0 0
    %85 = vmatprep.subr.bf16.mxu0 0
    %86 = vmatpush1.bf16.msra.mxu0 0
    %87 = vmatprep.subr.bf16.mxu0 0
    %88 = vmatpush1.bf16.msra.mxu0 0
    %89 = vmatprep.subr.bf16.mxu0 0
    %90 = vmatpush1.bf16.msra.mxu0 0
    %91 = vmatprep.subr.bf16.mxu0 0
    %92 = vmatpush1.bf16.msra.mxu0 0
    %93 = vmatprep.subr.bf16.mxu0 0
    %94 = vmatpush1.bf16.msra.mxu0 0
    %95 = vmatprep.subr.bf16.mxu0 0
    %96 = vmatpush1.bf16.msra.mxu0 0
    %97 = vmatprep.subr.bf16.mxu0 0
    %98 = vmatpush1.bf16.msra.mxu0 0
    %99 = vmatprep.subr.bf16.mxu0 0
    %100 = vmatpush1.bf16.msra.mxu0 0
    %101 = vmatprep.subr.bf16.mxu0 0
    %102 = vmatpush1.bf16.msra.mxu0 0
    %103 = vmatprep.subr.bf16.mxu0 0
    %104 = vmatpush1.bf16.msra.mxu0 0
    %105 = vmatprep.mubr.bf16.mxu0 0
    %106 = vmatmul.mubr.bf16.gmra.mrb[0].mxu0 %v71
    %v107 = vpop.f32.mrb[0].mxu0
    %v108 = vadd.f32 %v50, %v107
    %v109 = vpop.f32.mrb[0].mxu0
    %v110 = vpop.f32.mrb[0].mxu0
    %v111 = vadd.f32 %v50, %v110
    %v112 = vpop.f32.mrb[0].mxu0
    %113 = vdwg.mxu0
    %v114 = vld [vmem:[#allocation2] sm:$0xf]
    %v115 = vld [vmem:[#allocation2 + $0x4] sm:$0xf]
    %v116 = vunpack.c.l.bf16 %v114
    %v117 = vunpack.c.l.bf16 %v115
    %v118 = vadd.f32 %v108, %v116
    %v119 = vadd.f32 %v111, %v117
    %v120 = vsel %vm69, %v118, 0.0
    %121 = vadd.xlane.f32.xlu0 %v120
    %v122 = vpop.xlane.xlu0 %121
    %v123 = vsel %vm69, %v119, 0.0
    %124 = vadd.xlane.f32.xlu0 %v123
    %v125 = vpop.xlane.xlu0 %124
    %v126 = vrcp.pop 32.0
    %v127 = vmul.f32 %v122, %v126
    %v128 = vmul.f32 %v125, %v126
    %v129 = vmul.f32 %v118, %v118
    %v130 = vmul.f32 %v119, %v119
    %v131 = vsel %vm69, %v129, 0.0
    %132 = vadd.xlane.f32.xlu0 %v131
    %v133 = vpop.xlane.xlu0 %132
    %v134 = vsel %vm69, %v130, 0.0
    %135 = vadd.xlane.f32.xlu0 %v134
    %v136 = vpop.xlane.xlu0 %135
    %v137 = vmul.f32 %v133, %v126
    %v138 = vmul.f32 %v136, %v126
    %v139 = vmul.f32 %v127, %v127
    %v140 = vmul.f32 %v128, %v128
    %v141 = vsub.f32 %v137, %v139
    %v142 = vsub.f32 %v138, %v140
    %v143 = vmax.f32 %v141, 0.0
    %v144 = vmax.f32 %v142, 0.0
    %v145 = vadd.f32 %v143, 1e-12
    %v146 = vadd.f32 %v144, 1e-12
    %v147 = vrsqrt.pop %v145
    %v148 = vrsqrt.pop %v146
    %v149 = vsub.f32 %v118, %v127
    %v150 = vsub.f32 %v119, %v128
    %v151 = vmul.f32 %v149, %v147
    %v152 = vmul.f32 %v150, %v148
    %v153 = vld [vmem:[%s4] sm:$0x1]
    %v155 = vlaneseq
    %v156 = vshrl.u32 %v155, 7
    %v157 = vsub.s32 0, %v156
    %v158 = vrot.slane %v153, %v157
    %v160 = vmul.f32 %v158, %v151
    %v161 = vmul.f32 %v158, %v152
    %v162 = vld [vmem:[%s5] sm:$0x1]
    %v164 = vlaneseq
    %v165 = vshrl.u32 %v164, 7
    %v166 = vsub.s32 0, %v165
    %v167 = vrot.slane %v162, %v166
    %v169 = vadd.f32 %v160, %v167
    %v170 = vadd.f32 %v161, %v167
    %v171 = vpack.c.bf16 %v170, %v169
    %v173 = vunpack.c.l.b16 %v171
    %v174 = vunpack.c.h.b16 %v171
    %v175 = vpack.c.b16 %v173, %v173
    %v176 = vpack.c.b16 %v174, %v174
    %vm179 = vcmask 257024
    %180 = vst.msk [vmem:[#allocation5] sm:$0xf] %vm179, %v175
    %181 = vst.msk [vmem:[#allocation5 + $0x4] sm:$0xf] %vm179, %v176
    // Predicated region
    $region30: #{_bert_self_output_call.1} parent=1 // pred_check
      _
    $region31: #{_bert_self_output_call.1} parent=1 // pred_check_branch
      %183 = sbr.rel (0) target = $region33
    $region32: #{_bert_self_output_call.1} parent=1 // pred_region
      %s185 = ssub.s32 128, 128
      %186 = vsyncadd [#allocation4], %s185
      %s187 = sshll.u32 [#allocation5], 4
      %s188 = int_to_ptr.vmem [resolvable:$true] %s187
      %193 = dma.vmem_to_hbm [thread:$0]  %s188, 128, %s6, [#allocation4], 64, 64, 4
    $region33: #{_bert_self_output_call.1} parent=1 // pred_fallthru
      _
    // Predicated region
    $region34: #{_bert_self_output_call.1} parent=1 // pred_check
      _
    $region35: #{_bert_self_output_call.1} parent=1 // pred_check_branch
      %195 = sbr.rel (0) target = $region37
    $region36: #{_bert_self_output_call.1} parent=1 // pred_region
      %196 = dma.done [#allocation4], 128
    $region37: #{_bert_self_output_call.1} parent=1 // pred_fallthru
      _
    %197 = vsyncpa [#allocation3], 1
    %198 = vsyncpa [#allocation4], 1

</llo_original>
